<compile_context>
chip_gen: v6e
topology: v6e:2x2x1
jax: 0.10.0
libtpu: 0.0.40
codegen_flags: <defaults>
</compile_context>

<pallas_src>
import functools

import jax
import jax.numpy as jnp
from jax.experimental import pallas as pl
from jax.experimental.pallas import tpu as pltpu


# --------------------- Kernel 1: shared model (projection + ReLU) ---------------------
def shared_kernel(x_ref, w_ref, b_ref, o_ref):
    # x_ref: (B, W, V, C)        -- one frame window of the input
    # w_ref: (C, D), b_ref: (1, D)
    # o_ref: (1, B, W, V, D)     -- window-major output slab
    B, W, V, C = x_ref.shape
    D = w_ref.shape[1]
    xf = x_ref[...].reshape(B * W * V, C)        # leading-dim merge only: free relayout
    h = jnp.dot(xf, w_ref[...], preferred_element_type=jnp.float32)
    h = jnp.maximum(h + b_ref[...], 0.0)
    o_ref[0] = h.reshape(B, W, V, D)             # leading-dim split only: free relayout


def shared_forward(x, w1, b1, num_splits):
    B, T, V, C = x.shape
    D = w1.shape[1]
    W = T // num_splits
    return pl.pallas_call(
        shared_kernel,
        out_shape=jax.ShapeDtypeStruct((num_splits, B, W, V, D), jnp.float32),
        grid=(num_splits,),
        in_specs=[
            pl.BlockSpec((B, W, V, C), lambda w: (0, w, 0, 0)),
            pl.BlockSpec((C, D), lambda w: (0, 0)),
            pl.BlockSpec((1, D), lambda w: (0, 0)),
        ],
        out_specs=pl.BlockSpec((1, B, W, V, D), lambda w: (w, 0, 0, 0, 0)),
        compiler_params=pltpu.CompilerParams(
            dimension_semantics=("parallel",),
            vmem_limit_bytes=32 * 1024 * 1024,
        ),
    )(x, w1, b1)


# --------- Kernel 2: main + aux classifiers with cyclic frame windows (modular) --------
def branch_kernel(h_ref, w_ref, b_ref, o_ref):
    # h_ref: (1, B, W*V*D)      -- frame window (g + k) % num_splits of the shared output
    # w_ref: (1, 1, W*V*D, Kp)  -- branch g, weight window k (K padded to 128 lanes)
    # b_ref: (1, 1, Kp)
    # o_ref: (1, B, Kp)         -- resident accumulator across the k (window) axis
    k = pl.program_id(1)

    @pl.when(k == 0)
    def _init():
        # broadcast the bias across the batch rows of the resident output block
        o_ref[0] = jnp.broadcast_to(b_ref[0], o_ref.shape[1:])

    part = jnp.dot(h_ref[0], w_ref[0, 0], preferred_element_type=jnp.float32)  # (B, Kp)
    o_ref[0] = o_ref[0] + part


def wifacct_forward(x, params, num_aux_branches):
    """Returns (o_main, o_aux) matching the PyTorch module's forward."""
    B, T, V, C = x.shape
    num_splits = num_aux_branches + 1
    assert T % num_splits == 0, (
        f"num_frames ({T}) must be divisible by num_splits ({num_splits})")
    W = T // num_splits                                   # window_size

    w1, b1, w2, b2 = params["w1"], params["b1"], params["w2"], params["b2"]
    D = w1.shape[1]
    VD = V * D
    WVD = W * VD
    K = w2.shape[-1]
    Kp = ((K + 127) // 128) * 128                         # lane-dense output width

    # shared model -> window-major slab, no XLA transpose/concat needed.
    h_win = shared_forward(x, w1, b1, num_splits)         # (ns, B, W, V, D)
    h2 = h_win.reshape(num_splits, B, WVD)                # contiguous trailing merge

    # classifier weights: (ns, T, VD, K) -> (ns, ns_windows, W*VD, Kp); pad K lanes.
    # (In a real deployment this padding/reshape would be done once at init.)
    w2w = w2.reshape(num_splits, num_splits, WVD, K)
    w2p = jnp.pad(w2w, ((0, 0), (0, 0), (0, 0), (0, Kp - K)))
    b2p = jnp.pad(b2, ((0, 0), (0, 0), (0, Kp - K)))

    out = pl.pallas_call(
        branch_kernel,
        out_shape=jax.ShapeDtypeStruct((num_splits, B, Kp), jnp.float32),
        grid=(num_splits, num_splits),                    # (branch g, window k)
        in_specs=[
            # cyclic window: branch g, step k reads frame-window (g + k) % num_splits
            pl.BlockSpec((1, B, WVD), lambda g, k: ((g + k) % num_splits, 0, 0)),
            pl.BlockSpec((1, 1, WVD, Kp), lambda g, k: (g, k, 0, 0)),
            pl.BlockSpec((1, 1, Kp), lambda g, k: (g, 0, 0)),
        ],
        out_specs=pl.BlockSpec((1, B, Kp), lambda g, k: (g, 0, 0)),
        compiler_params=pltpu.CompilerParams(
            dimension_semantics=("parallel", "arbitrary"),
            vmem_limit_bytes=32 * 1024 * 1024,
        ),
    )(h2, w2p, b2p)

    out = out[:, :, :K]                                   # drop lane padding
    o_main = out[0]                                       # (B, K)
    o_aux = jnp.transpose(out[1:], (1, 0, 2))             # (B, num_aux, K) == stack(dim=1)
    return o_main, o_aux


wifacct_forward_jit = jax.jit(wifacct_forward, static_argnames="num_aux_branches")


# --------------------------------- reference (pure JAX) --------------------------------
def reference_forward(x, params, num_aux_branches):
    B, T, V, C = x.shape
    w1, b1, w2, b2 = params["w1"], params["b1"], params["w2"], params["b2"]
    D = w1.shape[1]
    h = jnp.maximum(x.reshape(-1, C) @ w1 + b1, 0.0).reshape(B, T, V, D)
    num_splits = num_aux_branches + 1
    window_size = T // num_splits

    def branch(hh, wb, bb):
        hf = hh.reshape(B, T, V * D)
        return jnp.einsum("btf,tfk->bk", hf, wb) + bb[0]

    o_main = branch(h, w2[0], b2[0])
    fi = jnp.concatenate([jnp.arange(T), jnp.arange(T)])
    o_auxs = []
    for i in range(num_aux_branches):
        s = window_size * (i + 1)
        idx = fi[s:s + T]
        o_auxs.append(branch(h[:, idx], w2[i + 1], b2[i + 1]))
    return o_main, jnp.stack(o_auxs, axis=1)


# -------------------------------------- main --------------------------------------------
if __name__ == "__main__":
    B, T, V, C = 2, 8, 8, 8        # batch, frames, joints, in-features
    D, K = 32, 16                  # shared hidden dim, classifier outputs
    num_aux_branches = 3           # num_splits = 4, window_size = 2

    key = jax.random.PRNGKey(0)
    k_x, k_w1, k_b1, k_w2, k_b2 = jax.random.split(key, 5)

    x = jax.random.normal(k_x, (B, T, V, C), dtype=jnp.float32)

    num_splits = num_aux_branches + 1
    w1 = 0.1 * jax.random.normal(k_w1, (C, D), dtype=jnp.float32)
    b1 = 0.1 * jax.random.normal(k_b1, (1, D), dtype=jnp.float32)
    # main classifier weights; aux branches are deepcopies of main at __init__
    w2_main = 0.05 * jax.random.normal(k_w2, (T, V * D, K), dtype=jnp.float32)
    b2_main = 0.05 * jax.random.normal(k_b2, (1, K), dtype=jnp.float32)
    w2 = jnp.tile(w2_main[None], (num_splits, 1, 1, 1))
    b2 = jnp.tile(b2_main[None], (num_splits, 1, 1))

    params = {"w1": w1, "b1": b1, "w2": w2, "b2": b2}

    o_main, o_aux = wifacct_forward_jit(x, params, num_aux_branches)
    jax.block_until_ready((o_main, o_aux))

    r_main, r_aux = reference_forward(x, params, num_aux_branches)
    assert o_main.shape == (B, K) and o_aux.shape == (B, num_aux_branches, K)
    assert jnp.allclose(o_main, r_main, atol=1e-3, rtol=1e-3)
    assert jnp.allclose(o_aux, r_aux, atol=1e-3, rtol=1e-3)

    print("KERNEL_OK")
</pallas_src>

<mosaic_0001>
module attributes {stable_mosaic.version = 11 : i64} {
  func.func @shared_kernel(%arg0: i32, %arg1: memref<2x2x8x8xf32, #tpu.memory_space<vmem>>, %arg2: memref<8x32xf32, #tpu.memory_space<vmem>>, %arg3: memref<1x32xf32, #tpu.memory_space<vmem>>, %arg4: memref<1x2x2x8x32xf32, #tpu.memory_space<vmem>>) attributes {dimension_semantics = [#tpu.dimension_semantics<parallel>], iteration_bounds = array<i64: 4>, scalar_prefetch = 0 : i64, scratch_operands = 0 : i64, tpu.core_type = #tpu.core_type<tc>, window_params = [{transform_indices = @transform_0, window_bounds = array<i64: 2, 2, 8, 8>}, {pipeline_mode = #tpu.pipeline_mode<synchronous>, transform_indices = @transform_1, window_bounds = array<i64: 8, 32>}, {pipeline_mode = #tpu.pipeline_mode<synchronous>, transform_indices = @transform_2, window_bounds = array<i64: 1, 32>}, {transform_indices = @transform_3, window_bounds = array<i64: 1, 2, 2, 8, 32>}]} {
    %c0 = arith.constant 0 : index
    %c0_0 = arith.constant 0 : index
    %c0_1 = arith.constant 0 : index
    %c0_2 = arith.constant 0 : index
    %0 = vector.load %arg1[%c0, %c0_0, %c0_1, %c0_2] : memref<2x2x8x8xf32, #tpu.memory_space<vmem>>, vector<2x2x8x8xf32>
    %1 = vector.shape_cast %0 : vector<2x2x8x8xf32> to vector<32x8xf32>
    %c0_3 = arith.constant 0 : index
    %c0_4 = arith.constant 0 : index
    %2 = vector.load %arg2[%c0_3, %c0_4] : memref<8x32xf32, #tpu.memory_space<vmem>>, vector<8x32xf32>
    %cst = arith.constant dense<0.000000e+00> : vector<32x32xf32>
    %3 = tpu.matmul %1, %2, %cst {dimension_numbers = #tpu.dot_dimension_numbers<[1], [0], [0], [1], [0, 0, 1, 1], [], []>} : vector<32x8xf32>, vector<8x32xf32>, vector<32x32xf32> -> vector<32x32xf32>
    %c0_5 = arith.constant 0 : index
    %c0_6 = arith.constant 0 : index
    %4 = vector.load %arg3[%c0_5, %c0_6] : memref<1x32xf32, #tpu.memory_space<vmem>>, vector<1x32xf32>
    %5 = vector.broadcast %4 : vector<1x32xf32> to vector<32x32xf32>
    %6 = arith.addf %3, %5 : vector<32x32xf32>
    %cst_7 = arith.constant 0.000000e+00 : f32
    %7 = vector.broadcast %cst_7 : f32 to vector<32x32xf32>
    %8 = arith.maximumf %6, %7 : vector<32x32xf32>
    %9 = vector.shape_cast %8 : vector<32x32xf32> to vector<2x2x8x32xf32>
    %c0_8 = arith.constant 0 : index
    %c0_9 = arith.constant 0 : index
    %c0_10 = arith.constant 0 : index
    %c0_11 = arith.constant 0 : index
    %c0_12 = arith.constant 0 : index
    %10 = vector.load %arg4[%c0_8, %c0_9, %c0_10, %c0_11, %c0_12] : memref<1x2x2x8x32xf32, #tpu.memory_space<vmem>>, vector<1x2x2x8x32xf32>
    %11 = vector.shape_cast %10 : vector<1x2x2x8x32xf32> to vector<2x2x8x32xf32>
    %12 = vector.shape_cast %9 : vector<2x2x8x32xf32> to vector<1x2x2x8x32xf32>
    tpu.vector_store %arg4[%c0_8, %c0_9, %c0_10, %c0_11, %c0_12], %12 {strides = array<i32>} : memref<1x2x2x8x32xf32, #tpu.memory_space<vmem>>, vector<1x2x2x8x32xf32>,
    return
  }
  func.func @transform_0(%arg0: i32) -> (i32, i32, i32, i32) {
    %c0_i32 = arith.constant 0 : i32
    %c0_i32_0 = arith.constant 0 : i32
    %c0_i32_1 = arith.constant 0 : i32
    %c0_i32_2 = arith.constant 0 : i32
    return %c0_i32, %arg0, %c0_i32_0, %c0_i32_1 : i32, i32, i32, i32
  }
  func.func @transform_1(%arg0: i32) -> (i32, i32) {
    %c0_i32 = arith.constant 0 : i32
    %c0_i32_0 = arith.constant 0 : i32
    %c0_i32_1 = arith.constant 0 : i32
    return %c0_i32, %c0_i32_0 : i32, i32
  }
  func.func @transform_2(%arg0: i32) -> (i32, i32) {
    %c0_i32 = arith.constant 0 : i32
    %c0_i32_0 = arith.constant 0 : i32
    %c0_i32_1 = arith.constant 0 : i32
    return %c0_i32, %c0_i32_0 : i32, i32
  }
  func.func @transform_3(%arg0: i32) -> (i32, i32, i32, i32, i32) {
    %c0_i32 = arith.constant 0 : i32
    %c0_i32_0 = arith.constant 0 : i32
    %c0_i32_1 = arith.constant 0 : i32
    %c0_i32_2 = arith.constant 0 : i32
    %c0_i32_3 = arith.constant 0 : i32
    return %arg0, %c0_i32, %c0_i32_0, %c0_i32_1, %c0_i32_2 : i32, i32, i32, i32, i32
  }
}

module attributes {stable_mosaic.version = 11 : i64} {
  func.func @branch_kernel(%arg0: i32, %arg1: i32, %arg2: memref<1x2x512xf32, #tpu.memory_space<vmem>>, %arg3: memref<1x1x512x128xf32, #tpu.memory_space<vmem>>, %arg4: memref<1x1x128xf32, #tpu.memory_space<vmem>>, %arg5: memref<1x2x128xf32, #tpu.memory_space<vmem>>) attributes {dimension_semantics = [#tpu.dimension_semantics<parallel>, #tpu.dimension_semantics<arbitrary>], iteration_bounds = array<i64: 4, 4>, scalar_prefetch = 0 : i64, scratch_operands = 0 : i64, tpu.core_type = #tpu.core_type<tc>, window_params = [{transform_indices = @transform_0, window_bounds = array<i64: 1, 2, 512>}, {transform_indices = @transform_1, window_bounds = array<i64: 1, 1, 512, 128>}, {transform_indices = @transform_2, window_bounds = array<i64: 1, 1, 128>}, {transform_indices = @transform_3, window_bounds = array<i64: 1, 2, 128>}]} {
    %c0_i32 = arith.constant 0 : i32
    %0 = arith.cmpi eq, %arg1, %c0_i32 : i32
    %1 = arith.extui %0 : i1 to i32
    %c0_i32_0 = arith.constant 0 : i32
    %2 = arith.cmpi ne, %1, %c0_i32_0 : i32
    scf.if %2 {
      %c0_13 = arith.constant 0 : index
      %c0_14 = arith.constant 0 : index
      %c0_15 = arith.constant 0 : index
      %14 = vector.load %arg4[%c0_13, %c0_14, %c0_15] : memref<1x1x128xf32, #tpu.memory_space<vmem>>, vector<1x1x128xf32>
      %15 = vector.shape_cast %14 : vector<1x1x128xf32> to vector<1x128xf32>
      %16 = vector.shape_cast %15 : vector<1x128xf32> to vector<1x128xf32>
      %17 = vector.broadcast %16 : vector<1x128xf32> to vector<2x128xf32>
      %c0_16 = arith.constant 0 : index
      %c0_17 = arith.constant 0 : index
      %c0_18 = arith.constant 0 : index
      %18 = vector.load %arg5[%c0_16, %c0_17, %c0_18] : memref<1x2x128xf32, #tpu.memory_space<vmem>>, vector<1x2x128xf32>
      %19 = vector.shape_cast %18 : vector<1x2x128xf32> to vector<2x128xf32>
      %20 = vector.shape_cast %17 : vector<2x128xf32> to vector<1x2x128xf32>
      tpu.vector_store %arg5[%c0_16, %c0_17, %c0_18], %20 {strides = array<i32>} : memref<1x2x128xf32, #tpu.memory_space<vmem>>, vector<1x2x128xf32>,
    } else {
    }
    %c0 = arith.constant 0 : index
    %c0_1 = arith.constant 0 : index
    %c0_2 = arith.constant 0 : index
    %3 = vector.load %arg2[%c0, %c0_1, %c0_2] : memref<1x2x512xf32, #tpu.memory_space<vmem>>, vector<1x2x512xf32>
    %4 = vector.shape_cast %3 : vector<1x2x512xf32> to vector<2x512xf32>
    %c0_3 = arith.constant 0 : index
    %c0_4 = arith.constant 0 : index
    %c0_5 = arith.constant 0 : index
    %c0_6 = arith.constant 0 : index
    %5 = vector.load %arg3[%c0_3, %c0_4, %c0_5, %c0_6] : memref<1x1x512x128xf32, #tpu.memory_space<vmem>>, vector<1x1x512x128xf32>
    %6 = vector.shape_cast %5 : vector<1x1x512x128xf32> to vector<512x128xf32>
    %cst = arith.constant dense<0.000000e+00> : vector<2x128xf32>
    %7 = tpu.matmul %4, %6, %cst {dimension_numbers = #tpu.dot_dimension_numbers<[1], [0], [0], [1], [0, 0, 1, 1], [], []>} : vector<2x512xf32>, vector<512x128xf32>, vector<2x128xf32> -> vector<2x128xf32>
    %c0_7 = arith.constant 0 : index
    %c0_8 = arith.constant 0 : index
    %c0_9 = arith.constant 0 : index
    %8 = vector.load %arg5[%c0_7, %c0_8, %c0_9] : memref<1x2x128xf32, #tpu.memory_space<vmem>>, vector<1x2x128xf32>
    %9 = vector.shape_cast %8 : vector<1x2x128xf32> to vector<2x128xf32>
    %10 = arith.addf %9, %7 : vector<2x128xf32>
    %c0_10 = arith.constant 0 : index
    %c0_11 = arith.constant 0 : index
    %c0_12 = arith.constant 0 : index
    %11 = vector.load %arg5[%c0_10, %c0_11, %c0_12] : memref<1x2x128xf32, #tpu.memory_space<vmem>>, vector<1x2x128xf32>
    %12 = vector.shape_cast %11 : vector<1x2x128xf32> to vector<2x128xf32>
    %13 = vector.shape_cast %10 : vector<2x128xf32> to vector<1x2x128xf32>
    tpu.vector_store %arg5[%c0_10, %c0_11, %c0_12], %13 {strides = array<i32>} : memref<1x2x128xf32, #tpu.memory_space<vmem>>, vector<1x2x128xf32>,
    return
  }
  func.func @transform_0(%arg0: i32, %arg1: i32) -> (i32, i32, i32) {
    %0 = arith.addi %arg0, %arg1 : i32
    %c4_i32 = arith.constant 4 : i32
    %c0_i32 = arith.constant 0 : i32
    %1 = arith.cmpi eq, %c4_i32, %c0_i32 : i32
    %c1_i32 = arith.constant 1 : i32
    %2 = arith.select %1, %c1_i32, %c4_i32 : i32
    %3 = arith.remsi %0, %2 : i32
    %c0_i32_0 = arith.constant 0 : i32
    %4 = arith.cmpi ne, %3, %c0_i32_0 : i32
    %c0_i32_1 = arith.constant 0 : i32
    %5 = arith.cmpi slt, %3, %c0_i32_1 : i32
    %c0_i32_2 = arith.constant 0 : i32
    %6 = arith.cmpi slt, %2, %c0_i32_2 : i32
    %7 = arith.xori %5, %6 : i1
    %8 = arith.andi %7, %4 : i1
    %9 = arith.addi %3, %2 : i32
    %10 = arith.select %8, %9, %3 : i32
    %c0_i32_3 = arith.constant 0 : i32
    %c0_i32_4 = arith.constant 0 : i32
    %c0_i32_5 = arith.constant 0 : i32
    return %10, %c0_i32_3, %c0_i32_4 : i32, i32, i32
  }
  func.func @transform_1(%arg0: i32, %arg1: i32) -> (i32, i32, i32, i32) {
    %c0_i32 = arith.constant 0 : i32
    %c0_i32_0 = arith.constant 0 : i32
    %c0_i32_1 = arith.constant 0 : i32
    return %arg0, %arg1, %c0_i32, %c0_i32_0 : i32, i32, i32, i32
  }
  func.func @transform_2(%arg0: i32, %arg1: i32) -> (i32, i32, i32) {
    %c0_i32 = arith.constant 0 : i32
    %c0_i32_0 = arith.constant 0 : i32
    %c0_i32_1 = arith.constant 0 : i32
    return %arg0, %c0_i32, %c0_i32_0 : i32, i32, i32
  }
  func.func @transform_3(%arg0: i32, %arg1: i32) -> (i32, i32, i32) {
    %c0_i32 = arith.constant 0 : i32
    %c0_i32_0 = arith.constant 0 : i32
    %c0_i32_1 = arith.constant 0 : i32
    return %arg0, %c0_i32, %c0_i32_0 : i32, i32, i32
  }
}

</mosaic_0001>

<llo_original>
// kernel: wifacct_forward.2
$region0: #{wifacct_forward.2}
  #allocation0 [shape = 'u32[]', space=smem, size = 0x4, offset = 0x4, fixed_abs, tag = 'smem constant byte address 0x4 - core index']
  #allocation1 [shape = 'u32[144,128]{1,0:T(1,128)}', space=vmem, size = 0x12000, scoped, tag = 'internal scratch']
  %s0 = inlined_call_operand.vmem [shape: f32[2,8,8,8], index: 0, kind: input, shape index: {}]
  %s1 = inlined_call_operand.vmem [shape: f32[8,32], index: 1, kind: input, shape index: {}]
  %s2 = inlined_call_operand.vmem [shape: f32[1,32], index: 2, kind: input, shape index: {}]
  %s3 = inlined_call_operand.vmem [shape: f32[4,2,2,8,32], index: 3, kind: output, shape index: {}]
  %s4 = sld [smem:[#allocation0]]
  $region83: #{wifacct_forward.2} parent=0
    _
  %s6 = ssub.s32 1, %s4
  %s7 = scalar_select 0, %s6, %s4
  $region1: #{wifacct_forward.2} parent=0
    #allocation2 [shape = 'u8[32768]{0}', space=vmem, size = 0x8000, scoped, tag = 'input window, operand 0']
    loop: start=0, step=1, limit=6
    $region2: #{wifacct_forward.2} parent=1 // loop_pre_header
      _
    $region3: #{wifacct_forward.2} parent=1 // loop_header
      %s9 = sphi 0, %s13
      %p10 = scmp.ge.s32.totalorder %s9, 6
      %s19 = sphi 0, %s21
      %s22 = sphi 0, %s19
      %s23 = sphi 0, %s22
      %s39 = sphi 0, %s23
      %s43 = sphi 0, %s43
      %s45 = sphi 0, %s43
      %s46 = sphi 0, %s45
      %s60 = sphi 0, %s46
      %s64 = sphi 0, %s64
      %s66 = sphi 0, %s64
      %s67 = sphi 0, %s66
      %s81 = sphi 0, %s67
      %s87 = sphi 0, %s89
      %s90 = sphi 0, %s87
      %s91 = sphi 0, %s90
      %s107 = sphi 0, %s91
    $region4: #{wifacct_forward.2} parent=1 // loop_header_branch
      %12 = sbr.rel (%p10) target = $region8
    $region5: #{wifacct_forward.2} parent=1 // loop_body
      %s14 = ssub.s32 %s9, 1
      %s15 = ssub.s32 %s9, 2
      %s16 = sadd.s32 %s9, 1
      %s17 = ssub.s32 %s9, %s16
      %p18 = scmp.eq.s32.totalorder %s17, 0
      %s20 = sadd.s32 %s19, 1
      %s21 = scalar_select %p18, %s19, %s20
      %p24 = pneg %p18
      %p25 = scmp.eq.s32.totalorder %s9, 3
      %p26 = por %p24, %p25
      %p27 = scmp.ne.s32.totalorder %s19, %s22
      %p28 = scmp.eq.s32.totalorder %s9, 0
      %p29 = por %p27, %p28
      %p30 = scmp.ne.s32.totalorder %s19, %s22
      %p31 = scmp.eq.s32.totalorder %s14, 3
      %p32 = por %p30, %p31
      %p33 = scmp.ne.s32.totalorder %s22, %s23
      %p34 = scmp.eq.s32.totalorder %s14, 0
      %p35 = por %p33, %p34
      %p36 = scmp.ne.s32.totalorder %s22, %s23
      %p37 = scmp.eq.s32.totalorder %s15, 3
      %p38 = por %p36, %p37
      %p40 = scmp.ne.s32.totalorder %s23, %s39
      %p41 = scmp.eq.s32.totalorder %s15, 0
      %p42 = por %p40, %p41
      %s44 = sadd.s32 %s43, 1
      %p47 = scmp.eq.s32.totalorder %s9, 3
      %p48 = scmp.ne.s32.totalorder %s43, %s45
      %p49 = scmp.eq.s32.totalorder %s9, 0
      %p50 = por %p48, %p49
      %p51 = scmp.ne.s32.totalorder %s43, %s45
      %p52 = scmp.eq.s32.totalorder %s14, 3
      %p53 = por %p51, %p52
      %p54 = scmp.ne.s32.totalorder %s45, %s46
      %p55 = scmp.eq.s32.totalorder %s14, 0
      %p56 = por %p54, %p55
      %p57 = scmp.ne.s32.totalorder %s45, %s46
      %p58 = scmp.eq.s32.totalorder %s15, 3
      %p59 = por %p57, %p58
      %p61 = scmp.ne.s32.totalorder %s46, %s60
      %p62 = scmp.eq.s32.totalorder %s15, 0
      %p63 = por %p61, %p62
      %s65 = sadd.s32 %s64, 1
      %p68 = scmp.eq.s32.totalorder %s9, 3
      %p69 = scmp.ne.s32.totalorder %s64, %s66
      %p70 = scmp.eq.s32.totalorder %s9, 0
      %p71 = por %p69, %p70
      %p72 = scmp.ne.s32.totalorder %s64, %s66
      %p73 = scmp.eq.s32.totalorder %s14, 3
      %p74 = por %p72, %p73
      %p75 = scmp.ne.s32.totalorder %s66, %s67
      %p76 = scmp.eq.s32.totalorder %s14, 0
      %p77 = por %p75, %p76
      %p78 = scmp.ne.s32.totalorder %s66, %s67
      %p79 = scmp.eq.s32.totalorder %s15, 3
      %p80 = por %p78, %p79
      %p82 = scmp.ne.s32.totalorder %s67, %s81
      %p83 = scmp.eq.s32.totalorder %s15, 0
      %p84 = por %p82, %p83
      %s85 = ssub.s32 %s9, %s16
      %p86 = scmp.eq.s32.totalorder %s85, 0
      %s88 = sadd.s32 %s87, 1
      %s89 = scalar_select %p86, %s87, %s88
      %p92 = pneg %p86
      %p93 = scmp.eq.s32.totalorder %s9, 3
      %p94 = por %p92, %p93
      %p95 = scmp.ne.s32.totalorder %s87, %s90
      %p96 = scmp.eq.s32.totalorder %s9, 0
      %p97 = por %p95, %p96
      %p98 = scmp.ne.s32.totalorder %s87, %s90
      %p99 = scmp.eq.s32.totalorder %s14, 3
      %p100 = por %p98, %p99
      %p101 = scmp.ne.s32.totalorder %s90, %s91
      %p102 = scmp.eq.s32.totalorder %s14, 0
      %p103 = por %p101, %p102
      %p104 = scmp.ne.s32.totalorder %s90, %s91
      %p105 = scmp.eq.s32.totalorder %s15, 3
      %p106 = por %p104, %p105
      %p108 = scmp.ne.s32.totalorder %s91, %s107
      %p109 = scmp.eq.s32.totalorder %s15, 0
      %p110 = por %p108, %p109
      %p111 = scmp.le.s32.totalorder 1, %s9
      %p112 = scmp.lt.s32.totalorder %s9, 5
      %p113 = pnand %p111, %p112
      %p114 = pneg %p113
      // Predicated region
      $region9: #{wifacct_forward.2} parent=5 // pred_check
        _
      $region10: #{wifacct_forward.2} parent=5 // pred_check_branch
        %116 = sbr.rel (%p113) target = $region12
      $region11: #{wifacct_forward.2} parent=5 // pred_region
        %s117 = ssub.s32 %s9, 1
        // Predicated region
        $region13: #{wifacct_forward.2} parent=11 // pred_check
          %p118 = pneg %p56
        $region14: #{wifacct_forward.2} parent=11 // pred_check_branch
          %120 = sbr.rel (%p118) target = $region16
        $region15: #{wifacct_forward.2} parent=11 // pred_region
          _
        $region16: #{wifacct_forward.2} parent=11 // pred_fallthru
          _
        // Predicated region
        $region17: #{wifacct_forward.2} parent=11 // pred_check
          %p121 = pneg %p77
        $region18: #{wifacct_forward.2} parent=11 // pred_check_branch
          %123 = sbr.rel (%p121) target = $region20
        $region19: #{wifacct_forward.2} parent=11 // pred_region
          _
        $region20: #{wifacct_forward.2} parent=11 // pred_fallthru
          _
      $region12: #{wifacct_forward.2} parent=5 // pred_fallthru
        _
      %p124 = scmp.lt.s32.totalorder %s9, 4
      // Predicated region
      $region21: #{wifacct_forward.2} parent=5 // pred_check
        %p125 = pneg %p124
      $region22: #{wifacct_forward.2} parent=5 // pred_check_branch
        %127 = sbr.rel (%p125) target = $region24
      $region23: #{wifacct_forward.2} parent=5 // pred_region
        // Predicated region
        $region25: #{wifacct_forward.2} parent=23 // pred_check
          %p128 = pneg %p29
        $region26: #{wifacct_forward.2} parent=23 // pred_check_branch
          %130 = sbr.rel (%p128) target = $region28
        $region27: #{wifacct_forward.2} parent=23 // pred_region
          %s131 = sand.u32 %s19, 1
          %s132 = sand.u32 %s19, 1
          %s133 = smul.addr %s132, 32
          %s134 = scalar_lea.vmem [#allocation2], %s133
          %s135 = smul.u32 2, %s9
          %s136 = smul.addr %s135, 8
          %s137 = scalar_lea.vmem %s0, %s136
          // Predicated region
          $region29: #{wifacct_forward.2} parent=27 // pred_check
            _
          $region30: #{wifacct_forward.2} parent=27 // pred_check_branch
            %139 = sbr.rel (0) target = $region32
          $region31: #{wifacct_forward.2} parent=27 // pred_region
            // Predicated region
            $region33: #{wifacct_forward.2} parent=31 // pred_check
              _
            $region34: #{wifacct_forward.2} parent=31 // pred_check_branch
              %141 = sbr.rel (0) target = $region36
            $region35: #{wifacct_forward.2} parent=31 // pred_region
              // Predicated region
              $region48: #{wifacct_forward.2} parent=35 // pred_check
                _
              $region49: #{wifacct_forward.2} parent=35 // pred_check_branch
                %163 = sbr.rel (0) target = $region51
              $region50: #{wifacct_forward.2} parent=35 // pred_region
                loop: start=0, step=1, limit=1
                $region52: #{wifacct_forward.2} parent=50 // loop_pre_header
                  _
                $region53: #{wifacct_forward.2} parent=50 // loop_header
                  %s165 = sphi 0, %s169
                  %p166 = scmp.ge.s32.totalorder %s165, 1
                  %s170 = sphi %s137, %s137
                  %s171 = sphi %s134, %s134
                $region54: #{wifacct_forward.2} parent=50 // loop_header_branch
                  %168 = sbr.rel (%p166) target = $region58
                $region55: #{wifacct_forward.2} parent=50 // loop_body
                  %v172 = vld [vmem:[%s170] sm:$0xff]
                  %173 = vst [vmem:[%s171] sm:$0xff] %v172
                  %v174 = vld [vmem:[%s170 + $0x8] sm:$0xff]
                  %175 = vst [vmem:[%s171 + $0x8] sm:$0xff] %v174
                  %v176 = vld [vmem:[%s170 + $0x40] sm:$0xff]
                  %177 = vst [vmem:[%s171 + $0x10] sm:$0xff] %v176
                  %v178 = vld [vmem:[%s170 + $0x48] sm:$0xff]
                  %179 = vst [vmem:[%s171 + $0x18] sm:$0xff] %v178
                $region56: #{wifacct_forward.2} parent=50 // loop_footer
                  %s169 = sadd.s32 1, %s165
                $region57: #{wifacct_forward.2} parent=50 // loop_footer_branch
                  %164 = sbr.rel target = $region53
                $region58: #{wifacct_forward.2} parent=50 // loop_exit
                  _
              $region51: #{wifacct_forward.2} parent=35 // pred_fallthru
                _
              // Predicated region
              $region59: #{wifacct_forward.2} parent=35 // pred_check
                _
              $region60: #{wifacct_forward.2} parent=35 // pred_check_branch
                %181 = sbr.rel target = $region62
              $region61: #{wifacct_forward.2} parent=35 // pred_region
                _
              $region62: #{wifacct_forward.2} parent=35 // pred_fallthru
                _
            $region36: #{wifacct_forward.2} parent=31 // pred_fallthru
              _
            // Predicated region
            $region37: #{wifacct_forward.2} parent=31 // pred_check
              _
            $region38: #{wifacct_forward.2} parent=31 // pred_check_branch
              %143 = sbr.rel target = $region40
            $region39: #{wifacct_forward.2} parent=31 // pred_region
              %s145 = ssub.s32 256, 1
              loop: start=0, step=1, limit=1
              $region41: #{wifacct_forward.2} parent=39 // loop_pre_header
                _
              $region42: #{wifacct_forward.2} parent=39 // loop_header
                %s147 = sphi 0, %s151
                %p148 = scmp.ge.s32.totalorder %s147, 1
                %s152 = sphi %s137, %s137
                %s153 = sphi %s134, %s134
              $region43: #{wifacct_forward.2} parent=39 // loop_header_branch
                %150 = sbr.rel (%p148) target = $region47
              $region44: #{wifacct_forward.2} parent=39 // loop_body
                %v154 = vld [vmem:[%s152] sm:%s145]
                %155 = vst [vmem:[%s153] sm:%s145] %v154
                %v156 = vld [vmem:[%s152 + $0x8] sm:%s145]
                %157 = vst [vmem:[%s153 + $0x8] sm:%s145] %v156
                %v158 = vld [vmem:[%s152 + $0x40] sm:%s145]
                %159 = vst [vmem:[%s153 + $0x10] sm:%s145] %v158
                %v160 = vld [vmem:[%s152 + $0x48] sm:%s145]
                %161 = vst [vmem:[%s153 + $0x18] sm:%s145] %v160
              $region45: #{wifacct_forward.2} parent=39 // loop_footer
                %s151 = sadd.s32 1, %s147
              $region46: #{wifacct_forward.2} parent=39 // loop_footer_branch
                %146 = sbr.rel target = $region42
              $region47: #{wifacct_forward.2} parent=39 // loop_exit
                _
            $region40: #{wifacct_forward.2} parent=31 // pred_fallthru
              _
          $region32: #{wifacct_forward.2} parent=27 // pred_fallthru
            _
          %182 = vnop
        $region28: #{wifacct_forward.2} parent=23 // pred_fallthru
          _
      $region24: #{wifacct_forward.2} parent=5 // pred_fallthru
        _
      %p183 = scmp.le.s32.totalorder 1, %s9
      %p184 = scmp.lt.s32.totalorder %s9, 5
      %p185 = pnand %p183, %p184
      %p186 = pneg %p185
      // Predicated region
      $region63: #{wifacct_forward.2} parent=5 // pred_check
        _
      $region64: #{wifacct_forward.2} parent=5 // pred_check_branch
        %188 = sbr.rel (%p185) target = $region66
      $region65: #{wifacct_forward.2} parent=5 // pred_region
        %s189 = ssub.s32 %s9, 1
        %s190 = sand.u32 %s22, 1
        %s191 = sand.u32 %s22, 1
        %s192 = smul.addr %s191, 32
        %s193 = scalar_lea.vmem [#allocation2], %s192
        // Predicated region
        $region67: #{wifacct_forward.2} parent=65 // pred_check
          %p194 = pneg %p35
        $region68: #{wifacct_forward.2} parent=65 // pred_check_branch
          %196 = sbr.rel (%p194) target = $region70
        $region69: #{wifacct_forward.2} parent=65 // pred_region
          _
        $region70: #{wifacct_forward.2} parent=65 // pred_fallthru
          _
        %s197 = sand.u32 %s22, 1
        %s198 = sand.u32 %s22, 1
        %s199 = smul.addr %s198, 32
        %s200 = scalar_lea.vmem [#allocation2], %s199
        %p201 = pneg %p35
        %p202 = pneg %p32
        %p203 = pneg %p56
        %p204 = pneg %p53
        %p205 = pneg %p77
        %p206 = pneg %p74
        %p207 = pneg %p103
        %p208 = pneg %p100
        %p209 = scmp.lt.s32.totalorder %s14, 3
        %s210 = scalar_select %p209, %s14, 3
        %s211 = smul.addr %s210, 4
        %s212 = smul.addr %s211, 8
        %s213 = scalar_lea.vmem %s3, %s212
        %s214 = smul.u32 2, %s14
        %p215 = scmp.lt.s32.totalorder %s14, 3
        %s216 = scalar_select %p215, %s14, 3
        %s217 = smul.addr %s216, 4
        %s218 = smul.addr %s217, 8
        %s219 = scalar_lea.vmem %s3, %s218
        %v220 = vld [vmem:[%s193] sm:$0xff]
        %v221 = vld [vmem:[%s193 + $0x8] sm:$0xff]
        %v222 = vld [vmem:[%s193 + $0x10] sm:$0xff]
        %v223 = vld [vmem:[%s193 + $0x18] sm:$0xff]
        %v224 = vld [vmem:[%s1] sm:$0xff]
        %v225 = vld [vmem:[%s2] sm:$0x1]
        %v227 = vlaneseq
        %v228 = vshrl.u32 %v227, 7
        %v229 = vsub.s32 0, %v228
        %v230 = vrot.slane %v225, %v229
        %vm232 = vcmask 64512
        %v234 = vsel %vm232, %v220, 0
        %v237 = vsel %vm232, %v221, 0
        %v240 = vsel %vm232, %v222, 0
        %v243 = vsel %vm232, %v223, 0
        %245 = vmatprep.subr.mxu0 0.0
        %246 = vmatpush1.msra.mxu0 0.0
        %247 = vmatprep.subr.mxu0 0.0
        %248 = vmatpush1.msra.mxu0 0.0
        %249 = vmatprep.subr.mxu0 0.0
        %250 = vmatpush1.msra.mxu0 0.0
        %251 = vmatprep.subr.mxu0 0.0
        %252 = vmatpush1.msra.mxu0 0.0
        %253 = vmatprep.subr.mxu0 0.0
        %254 = vmatpush1.msra.mxu0 0.0
        %255 = vmatprep.subr.mxu0 0.0
        %256 = vmatpush1.msra.mxu0 0.0
        %257 = vmatprep.subr.mxu0 0.0
        %258 = vmatpush1.msra.mxu0 0.0
        %259 = vmatprep.subr.mxu0 0.0
        %260 = vmatpush1.msra.mxu0 0.0
        %261 = vmatprep.subr.mxu0 0.0
        %262 = vmatpush1.msra.mxu0 0.0
        %263 = vmatprep.subr.mxu0 0.0
        %264 = vmatpush1.msra.mxu0 0.0
        %265 = vmatprep.subr.mxu0 0.0
        %266 = vmatpush1.msra.mxu0 0.0
        %267 = vmatprep.subr.mxu0 0.0
        %268 = vmatpush1.msra.mxu0 0.0
        %269 = vmatprep.subr.mxu0 0.0
        %270 = vmatpush1.msra.mxu0 0.0
        %271 = vmatprep.subr.mxu0 0.0
        %272 = vmatpush1.msra.mxu0 0.0
        %273 = vmatprep.subr.mxu0 0.0
        %274 = vmatpush1.msra.mxu0 0.0
        %275 = vmatprep.subr.mxu0 0.0
        %276 = vmatpush1.msra.mxu0 %v224
        %277 = vmatprep.subr.mxu0 0.0
        %278 = vmatpush2.msra.mxu0 0.0
        %279 = vmatprep.subr.mxu0 0.0
        %280 = vmatpush2.msra.mxu0 0.0
        %281 = vmatprep.subr.mxu0 0.0
        %282 = vmatpush2.msra.mxu0 0.0
        %283 = vmatprep.subr.mxu0 0.0
        %284 = vmatpush2.msra.mxu0 0.0
        %285 = vmatprep.subr.mxu0 0.0
        %286 = vmatpush2.msra.mxu0 0.0
        %287 = vmatprep.subr.mxu0 0.0
        %288 = vmatpush2.msra.mxu0 0.0
        %289 = vmatprep.subr.mxu0 0.0
        %290 = vmatpush2.msra.mxu0 0.0
        %291 = vmatprep.subr.mxu0 0.0
        %292 = vmatpush2.msra.mxu0 0.0
        %293 = vmatprep.subr.mxu0 0.0
        %294 = vmatpush2.msra.mxu0 0.0
        %295 = vmatprep.subr.mxu0 0.0
        %296 = vmatpush2.msra.mxu0 0.0
        %297 = vmatprep.subr.mxu0 0.0
        %298 = vmatpush2.msra.mxu0 0.0
        %299 = vmatprep.subr.mxu0 0.0
        %300 = vmatpush2.msra.mxu0 0.0
        %301 = vmatprep.subr.mxu0 0.0
        %302 = vmatpush2.msra.mxu0 0.0
        %303 = vmatprep.subr.mxu0 0.0
        %304 = vmatpush2.msra.mxu0 0.0
        %305 = vmatprep.subr.mxu0 0.0
        %306 = vmatpush2.msra.mxu0 0.0
        %307 = vmatprep.subr.mxu0 0.0
        %308 = vmatpush2.msra.mxu0 0.0
        %309 = vmatprep.mubr.f32.mxu0 0.0
        %310 = vmatmul.mubr.f32.gmra.mxu0 %v234
        %v311 = vpop.f32.mrf.mxu0
        %v312 = vadd.f32 %v230, %v311
        %v313 = vpop.f32.mrf.mxu0
        %314 = vmatprep.mubr.f32.mxu0 0.0
        %315 = vmatmul.mubr.f32.gmra.mxu0 %v237
        %v316 = vpop.f32.mrf.mxu0
        %v317 = vadd.f32 %v230, %v316
        %v318 = vpop.f32.mrf.mxu0
        %319 = vmatprep.mubr.f32.mxu0 0.0
        %320 = vmatmul.mubr.f32.gmra.mxu0 %v240
        %v321 = vpop.f32.mrf.mxu0
        %v322 = vadd.f32 %v230, %v321
        %v323 = vpop.f32.mrf.mxu0
        %324 = vmatprep.mubr.f32.mxu0 0.0
        %325 = vmatmul.mubr.f32.gmra.mxu0 %v243
        %v326 = vpop.f32.mrf.mxu0
        %v327 = vadd.f32 %v230, %v326
        %v328 = vpop.f32.mrf.mxu0
        %329 = vdwg.mxu0
        %v330 = vmax.f32 %v312, 0.0
        %v331 = vmax.f32 %v317, 0.0
        %v332 = vmax.f32 %v322, 0.0
        %v333 = vmax.f32 %v327, 0.0
        %vm334 = vcmask 261120
        %335 = vst.msk [vmem:[%s219] sm:$0xff] %vm334, %v330
        %336 = vst.msk [vmem:[%s219 + $0x8] sm:$0xff] %vm334, %v331
        %337 = vst.msk [vmem:[%s219 + $0x10] sm:$0xff] %vm334, %v332
        %338 = vst.msk [vmem:[%s219 + $0x18] sm:$0xff] %vm334, %v333
        %p339 = scmp.lt.s32.totalorder %s14, 3
        %s340 = scalar_select %p339, %s14, 3
        %s341 = smul.addr %s340, 4
        %s342 = smul.addr %s341, 8
        %s343 = scalar_lea.vmem %s3, %s342
        // Predicated region
        $region71: #{wifacct_forward.2} parent=65 // pred_check
          %p344 = pneg %p100
        $region72: #{wifacct_forward.2} parent=65 // pred_check_branch
          %346 = sbr.rel (%p344) target = $region74
        $region73: #{wifacct_forward.2} parent=65 // pred_region
          _
        $region74: #{wifacct_forward.2} parent=65 // pred_fallthru
          _
      $region66: #{wifacct_forward.2} parent=5 // pred_fallthru
        _
      %p347 = scmp.le.s32.totalorder 2, %s9
      // Predicated region
      $region75: #{wifacct_forward.2} parent=5 // pred_check
        %p348 = pneg %p347
      $region76: #{wifacct_forward.2} parent=5 // pred_check_branch
        %350 = sbr.rel (%p348) target = $region78
      $region77: #{wifacct_forward.2} parent=5 // pred_region
        %s351 = ssub.s32 %s9, 2
        // Predicated region
        $region79: #{wifacct_forward.2} parent=77 // pred_check
          %p352 = pneg %p106
        $region80: #{wifacct_forward.2} parent=77 // pred_check_branch
          %354 = sbr.rel (%p352) target = $region82
        $region81: #{wifacct_forward.2} parent=77 // pred_region
          %p355 = scmp.lt.s32.totalorder %s15, 3
          %s356 = scalar_select %p355, %s15, 3
          %s357 = smul.addr %s356, 4
          %s358 = smul.addr %s357, 8
          %s359 = scalar_lea.vmem %s3, %s358
        $region82: #{wifacct_forward.2} parent=77 // pred_fallthru
          _
      $region78: #{wifacct_forward.2} parent=5 // pred_fallthru
        _
    $region6: #{wifacct_forward.2} parent=1 // loop_footer
      %s13 = sadd.s32 1, %s9
    $region7: #{wifacct_forward.2} parent=1 // loop_footer_branch
      %8 = sbr.rel target = $region3
    $region8: #{wifacct_forward.2} parent=1 // loop_exit
      _

// kernel: wifacct_forward.3
$region0: #{wifacct_forward.3}
  #allocation0 [shape = 'u32[]', space=smem, size = 0x4, offset = 0x4, fixed_abs, tag = 'smem constant byte address 0x4 - core index']
  #allocation1 [shape = 'u32[144,128]{1,0:T(1,128)}', space=vmem, size = 0x12000, scoped, tag = 'internal scratch']
  %s0 = inlined_call_operand.vmem [shape: f32[4,2,512], index: 0, kind: input, shape index: {}]
  %s1 = inlined_call_operand.vmem [shape: f32[4,4,512,128], index: 1, kind: input, shape index: {}]
  %s2 = inlined_call_operand.vmem [shape: f32[4,1,128], index: 2, kind: input, shape index: {}]
  %s3 = inlined_call_operand.vmem [shape: f32[4,2,128], index: 3, kind: output, shape index: {}]
  %s4 = sld [smem:[#allocation0]]
  $region49: #{wifacct_forward.3} parent=0
    _
  %s6 = ssub.s32 1, %s4
  %s7 = scalar_select 0, %s6, %s4
  loop: start=0, step=1, limit=18
  $region2: #{wifacct_forward.3} parent=0 // loop_pre_header
    _
  $region3: #{wifacct_forward.3} parent=0 // loop_header
    %s9 = sphi 0, %s13
    %p10 = scmp.ge.s32.totalorder %s9, 18
    %s16 = sphi 0, %s28
    %s17 = sphi 0, %s24
    %s18 = sphi 0, %s16
    %s19 = sphi 0, %s17
    %s20 = sphi 0, %s18
    %s21 = sphi 0, %s19
    %s57 = sphi 0, %s59
    %s60 = sphi 0, %s57
    %s61 = sphi 0, %s60
    %s77 = sphi 0, %s61
    %s85 = sphi 0, %s87
    %s88 = sphi 0, %s85
    %s89 = sphi 0, %s88
    %s105 = sphi 0, %s89
    %s111 = sphi 0, %s113
    %s114 = sphi 0, %s111
    %s115 = sphi 0, %s114
    %s131 = sphi 0, %s115
    %s137 = sphi 0, %s139
    %s140 = sphi 0, %s137
    %s141 = sphi 0, %s140
    %s157 = sphi 0, %s141
  $region4: #{wifacct_forward.3} parent=0 // loop_header_branch
    %12 = sbr.rel (%p10) target = $region8
  $region5: #{wifacct_forward.3} parent=0 // loop_body
    %s14 = ssub.s32 %s9, 1
    %s15 = ssub.s32 %s9, 2
    %s22 = sadd.s32 1, %s17
    %p23 = scmp.ge.s32.totalorder %s22, 4
    %s24 = scalar_select %p23, 0, %s22
    %s25 = sadd.s32 1, %s16
    %s26 = scalar_select %p23, %s25, %s16
    %p27 = scmp.ge.s32.totalorder %s26, 4
    %s28 = scalar_select %p27, 0, %s26
    %s29 = sadd.s32 %s16, %s17
    %p30 = scmp.lt.s32.totalorder %s29, 0
    %s31 = ssub.s32 0, %s29
    %s32 = scalar_select %p30, %s31, %s29
    %s33 = sand.u32 %s32, 3
    %s34 = ssub.s32 0, %s33
    %s35 = scalar_select %p30, %s34, %s33
    %p36 = scmp.ne.s32.totalorder %s35, 0
    %p37 = scmp.lt.s32.totalorder %s35, 0
    %p38 = pnand %p37, %p36
    %p39 = pneg %p38
    %s40 = sadd.s32 %s35, 4
    %s41 = scalar_select %p39, %s40, %s35
    %s42 = sadd.s32 %s28, %s24
    %p43 = scmp.lt.s32.totalorder %s42, 0
    %s44 = ssub.s32 0, %s42
    %s45 = scalar_select %p43, %s44, %s42
    %s46 = sand.u32 %s45, 3
    %s47 = ssub.s32 0, %s46
    %s48 = scalar_select %p43, %s47, %s46
    %p49 = scmp.ne.s32.totalorder %s48, 0
    %p50 = scmp.lt.s32.totalorder %s48, 0
    %p51 = pnand %p50, %p49
    %p52 = pneg %p51
    %s53 = sadd.s32 %s48, 4
    %s54 = scalar_select %p52, %s53, %s48
    %s55 = ssub.s32 %s41, %s54
    %p56 = scmp.eq.s32.totalorder %s55, 0
    %s58 = sadd.s32 %s57, 1
    %s59 = scalar_select %p56, %s57, %s58
    %p62 = pneg %p56
    %p63 = scmp.eq.s32.totalorder %s9, 15
    %p64 = por %p62, %p63
    %p65 = scmp.ne.s32.totalorder %s57, %s60
    %p66 = scmp.eq.s32.totalorder %s9, 0
    %p67 = por %p65, %p66
    %p68 = scmp.ne.s32.totalorder %s57, %s60
    %p69 = scmp.eq.s32.totalorder %s14, 15
    %p70 = por %p68, %p69
    %p71 = scmp.ne.s32.totalorder %s60, %s61
    %p72 = scmp.eq.s32.totalorder %s14, 0
    %p73 = por %p71, %p72
    %p74 = scmp.ne.s32.totalorder %s60, %s61
    %p75 = scmp.eq.s32.totalorder %s15, 15
    %p76 = por %p74, %p75
    %p78 = scmp.ne.s32.totalorder %s61, %s77
    %p79 = scmp.eq.s32.totalorder %s15, 0
    %p80 = por %p78, %p79
    %s81 = ssub.s32 %s16, %s28
    %s82 = ssub.s32 %s17, %s24
    %s83 = sor.u32 %s81, %s82
    %p84 = scmp.eq.s32.totalorder %s83, 0
    %s86 = sadd.s32 %s85, 1
    %s87 = scalar_select %p84, %s85, %s86
    %p90 = pneg %p84
    %p91 = scmp.eq.s32.totalorder %s9, 15
    %p92 = por %p90, %p91
    %p93 = scmp.ne.s32.totalorder %s85, %s88
    %p94 = scmp.eq.s32.totalorder %s9, 0
    %p95 = por %p93, %p94
    %p96 = scmp.ne.s32.totalorder %s85, %s88
    %p97 = scmp.eq.s32.totalorder %s14, 15
    %p98 = por %p96, %p97
    %p99 = scmp.ne.s32.totalorder %s88, %s89
    %p100 = scmp.eq.s32.totalorder %s14, 0
    %p101 = por %p99, %p100
    %p102 = scmp.ne.s32.totalorder %s88, %s89
    %p103 = scmp.eq.s32.totalorder %s15, 15
    %p104 = por %p102, %p103
    %p106 = scmp.ne.s32.totalorder %s89, %s105
    %p107 = scmp.eq.s32.totalorder %s15, 0
    %p108 = por %p106, %p107
    %s109 = ssub.s32 %s16, %s28
    %p110 = scmp.eq.s32.totalorder %s109, 0
    %s112 = sadd.s32 %s111, 1
    %s113 = scalar_select %p110, %s111, %s112
    %p116 = pneg %p110
    %p117 = scmp.eq.s32.totalorder %s9, 15
    %p118 = por %p116, %p117
    %p119 = scmp.ne.s32.totalorder %s111, %s114
    %p120 = scmp.eq.s32.totalorder %s9, 0
    %p121 = por %p119, %p120
    %p122 = scmp.ne.s32.totalorder %s111, %s114
    %p123 = scmp.eq.s32.totalorder %s14, 15
    %p124 = por %p122, %p123
    %p125 = scmp.ne.s32.totalorder %s114, %s115
    %p126 = scmp.eq.s32.totalorder %s14, 0
    %p127 = por %p125, %p126
    %p128 = scmp.ne.s32.totalorder %s114, %s115
    %p129 = scmp.eq.s32.totalorder %s15, 15
    %p130 = por %p128, %p129
    %p132 = scmp.ne.s32.totalorder %s115, %s131
    %p133 = scmp.eq.s32.totalorder %s15, 0
    %p134 = por %p132, %p133
    %s135 = ssub.s32 %s16, %s28
    %p136 = scmp.eq.s32.totalorder %s135, 0
    %s138 = sadd.s32 %s137, 1
    %s139 = scalar_select %p136, %s137, %s138
    %p142 = pneg %p136
    %p143 = scmp.eq.s32.totalorder %s9, 15
    %p144 = por %p142, %p143
    %p145 = scmp.ne.s32.totalorder %s137, %s140
    %p146 = scmp.eq.s32.totalorder %s9, 0
    %p147 = por %p145, %p146
    %p148 = scmp.ne.s32.totalorder %s137, %s140
    %p149 = scmp.eq.s32.totalorder %s14, 15
    %p150 = por %p148, %p149
    %p151 = scmp.ne.s32.totalorder %s140, %s141
    %p152 = scmp.eq.s32.totalorder %s14, 0
    %p153 = por %p151, %p152
    %p154 = scmp.ne.s32.totalorder %s140, %s141
    %p155 = scmp.eq.s32.totalorder %s15, 15
    %p156 = por %p154, %p155
    %p158 = scmp.ne.s32.totalorder %s141, %s157
    %p159 = scmp.eq.s32.totalorder %s15, 0
    %p160 = por %p158, %p159
    %p161 = scmp.le.s32.totalorder 1, %s9
    %p162 = scmp.lt.s32.totalorder %s9, 17
    %p163 = pnand %p161, %p162
    %p164 = pneg %p163
    // Predicated region
    $region9: #{wifacct_forward.3} parent=5 // pred_check
      _
    $region10: #{wifacct_forward.3} parent=5 // pred_check_branch
      %166 = sbr.rel (%p163) target = $region12
    $region11: #{wifacct_forward.3} parent=5 // pred_region
      %s167 = ssub.s32 %s9, 1
    $region12: #{wifacct_forward.3} parent=5 // pred_fallthru
      _
    %p168 = scmp.lt.s32.totalorder %s9, 16
    // Predicated region
    $region13: #{wifacct_forward.3} parent=5 // pred_check
      %p169 = pneg %p168
    $region14: #{wifacct_forward.3} parent=5 // pred_check_branch
      %171 = sbr.rel (%p169) target = $region16
    $region15: #{wifacct_forward.3} parent=5 // pred_region
      // Predicated region
      $region17: #{wifacct_forward.3} parent=15 // pred_check
        %p172 = pneg %p67
      $region18: #{wifacct_forward.3} parent=15 // pred_check_branch
        %174 = sbr.rel (%p172) target = $region20
      $region19: #{wifacct_forward.3} parent=15 // pred_region
        %s175 = sadd.s32 %s16, %s17
        %p176 = scmp.lt.s32.totalorder %s175, 0
        %s177 = ssub.s32 0, %s175
        %s178 = scalar_select %p176, %s177, %s175
        %s179 = sand.u32 %s178, 3
        %s180 = ssub.s32 0, %s179
        %s181 = scalar_select %p176, %s180, %s179
        %p182 = scmp.ne.s32.totalorder %s181, 0
        %p183 = scmp.lt.s32.totalorder %s181, 0
        %p184 = pnand %p183, %p182
        %p185 = pneg %p184
        %s186 = sadd.s32 %s181, 4
        %s187 = scalar_select %p185, %s186, %s181
        %p188 = scmp.lt.s32.totalorder %s187, 3
        %s189 = scalar_select %p188, %s187, 3
        %s190 = smul.addr %s189, 4
        %s191 = smul.addr %s190, 2
        %s192 = scalar_lea.vmem %s0, %s191
        %s193 = sadd.s32 %s16, %s17
        %p194 = scmp.lt.s32.totalorder %s193, 0
        %s195 = ssub.s32 0, %s193
        %s196 = scalar_select %p194, %s195, %s193
        %s197 = sand.u32 %s196, 3
        %s198 = ssub.s32 0, %s197
        %s199 = scalar_select %p194, %s198, %s197
        %p200 = scmp.ne.s32.totalorder %s199, 0
        %p201 = scmp.lt.s32.totalorder %s199, 0
        %p202 = pnand %p201, %p200
        %p203 = pneg %p202
        %s204 = sadd.s32 %s199, 4
        %s205 = scalar_select %p203, %s204, %s199
      $region20: #{wifacct_forward.3} parent=15 // pred_fallthru
        _
      // Predicated region
      $region21: #{wifacct_forward.3} parent=15 // pred_check
        %p206 = pneg %p95
      $region22: #{wifacct_forward.3} parent=15 // pred_check_branch
        %208 = sbr.rel (%p206) target = $region24
      $region23: #{wifacct_forward.3} parent=15 // pred_region
        %p209 = scmp.lt.s32.totalorder %s16, 3
        %s210 = scalar_select %p209, %s16, 3
        %p211 = scmp.lt.s32.totalorder %s17, 3
        %s212 = scalar_select %p211, %s17, 3
        %s213 = smul.addr %s212, 64
        %s214 = smul.addr %s210, 256
        %s215 = sadd.s32 %s213, %s214
        %s216 = smul.addr %s215, 8
        %s217 = scalar_lea.vmem %s1, %s216
      $region24: #{wifacct_forward.3} parent=15 // pred_fallthru
        _
      // Predicated region
      $region25: #{wifacct_forward.3} parent=15 // pred_check
        %p218 = pneg %p121
      $region26: #{wifacct_forward.3} parent=15 // pred_check_branch
        %220 = sbr.rel (%p218) target = $region28
      $region27: #{wifacct_forward.3} parent=15 // pred_region
        %p221 = scmp.lt.s32.totalorder %s16, 3
        %s222 = scalar_select %p221, %s16, 3
        %s223 = scalar_lea.vmem %s2, %s222
      $region28: #{wifacct_forward.3} parent=15 // pred_fallthru
        _
    $region16: #{wifacct_forward.3} parent=5 // pred_fallthru
      _
    %p224 = scmp.le.s32.totalorder 1, %s9
    %p225 = scmp.lt.s32.totalorder %s9, 17
    %p226 = pnand %p224, %p225
    %p227 = pneg %p226
    // Predicated region
    $region29: #{wifacct_forward.3} parent=5 // pred_check
      _
    $region30: #{wifacct_forward.3} parent=5 // pred_check_branch
      %229 = sbr.rel (%p226) target = $region32
    $region31: #{wifacct_forward.3} parent=5 // pred_region
      %s230 = ssub.s32 %s9, 1
      %s231 = sadd.s32 %s18, %s19
      %p232 = scmp.lt.s32.totalorder %s231, 0
      %s233 = ssub.s32 0, %s231
      %s234 = scalar_select %p232, %s233, %s231
      %s235 = sand.u32 %s234, 3
      %s236 = ssub.s32 0, %s235
      %s237 = scalar_select %p232, %s236, %s235
      %p238 = scmp.ne.s32.totalorder %s237, 0
      %p239 = scmp.lt.s32.totalorder %s237, 0
      %p240 = pnand %p239, %p238
      %p241 = pneg %p240
      %s242 = sadd.s32 %s237, 4
      %s243 = scalar_select %p241, %s242, %s237
      %p244 = scmp.lt.s32.totalorder %s243, 3
      %s245 = scalar_select %p244, %s243, 3
      %s246 = smul.addr %s245, 4
      %s247 = smul.addr %s246, 2
      %s248 = scalar_lea.vmem %s0, %s247
      %p249 = pneg %p73
      %p250 = pneg %p70
      %p251 = scmp.lt.s32.totalorder %s18, 3
      %s252 = scalar_select %p251, %s18, 3
      %p253 = scmp.lt.s32.totalorder %s19, 3
      %s254 = scalar_select %p253, %s19, 3
      %s255 = smul.addr %s254, 64
      %s256 = smul.addr %s252, 256
      %s257 = sadd.s32 %s255, %s256
      %s258 = smul.addr %s257, 8
      %s259 = scalar_lea.vmem %s1, %s258
      %p260 = pneg %p101
      %p261 = pneg %p98
      %p262 = scmp.lt.s32.totalorder %s18, 3
      %s263 = scalar_select %p262, %s18, 3
      %s264 = scalar_lea.vmem %s2, %s263
      %p265 = pneg %p127
      %p266 = pneg %p124
      %p267 = pneg %p153
      %p268 = pneg %p150
      %p269 = scmp.lt.s32.totalorder %s18, 3
      %s270 = scalar_select %p269, %s18, 3
      %s271 = smul.addr %s270, 2
      %s272 = scalar_lea.vmem %s3, %s271
      %s273 = sadd.s32 %s18, %s19
      %p274 = scmp.lt.s32.totalorder %s273, 0
      %s275 = ssub.s32 0, %s273
      %s276 = scalar_select %p274, %s275, %s273
      %s277 = sand.u32 %s276, 3
      %s278 = ssub.s32 0, %s277
      %s279 = scalar_select %p274, %s278, %s277
      %p280 = scmp.ne.s32.totalorder %s279, 0
      %p281 = scmp.lt.s32.totalorder %s279, 0
      %p282 = pnand %p281, %p280
      %p283 = pneg %p282
      %s284 = sadd.s32 %s279, 4
      %s285 = scalar_select %p283, %s284, %s279
      %p286 = scmp.lt.s32.totalorder %s285, 3
      %s287 = scalar_select %p286, %s285, 3
      %s288 = smul.addr %s287, 4
      %s289 = smul.addr %s288, 2
      %s290 = scalar_lea.vmem %s0, %s289
      %s291 = sadd.s32 %s18, %s19
      %p292 = scmp.lt.s32.totalorder %s291, 0
      %s293 = ssub.s32 0, %s291
      %s294 = scalar_select %p292, %s293, %s291
      %s295 = sand.u32 %s294, 3
      %s296 = ssub.s32 0, %s295
      %s297 = scalar_select %p292, %s296, %s295
      %p298 = scmp.ne.s32.totalorder %s297, 0
      %p299 = scmp.lt.s32.totalorder %s297, 0
      %p300 = pnand %p299, %p298
      %p301 = pneg %p300
      %s302 = sadd.s32 %s297, 4
      %s303 = scalar_select %p301, %s302, %s297
      %p304 = scmp.lt.s32.totalorder %s18, 3
      %s305 = scalar_select %p304, %s18, 3
      %p306 = scmp.lt.s32.totalorder %s19, 3
      %s307 = scalar_select %p306, %s19, 3
      %s308 = smul.addr %s307, 64
      %s309 = smul.addr %s305, 256
      %s310 = sadd.s32 %s308, %s309
      %s311 = smul.addr %s310, 8
      %s312 = scalar_lea.vmem %s1, %s311
      %p313 = scmp.lt.s32.totalorder %s18, 3
      %s314 = scalar_select %p313, %s18, 3
      %s315 = scalar_lea.vmem %s2, %s314
      %p316 = scmp.lt.s32.totalorder %s18, 3
      %s317 = scalar_select %p316, %s18, 3
      %s318 = smul.addr %s317, 2
      %s319 = scalar_lea.vmem %s3, %s318
      %p320 = scmp.eq.s32.totalorder %s19, 0
      // Predicated region
      $region33: #{wifacct_forward.3} parent=31 // pred_check
        %p321 = pneg %p320
      $region34: #{wifacct_forward.3} parent=31 // pred_check_branch
        %323 = sbr.rel (%p321) target = $region36
      $region35: #{wifacct_forward.3} parent=31 // pred_region
        %v324 = vld [vmem:[%s315] sm:$0x1]
        %v326 = vlaneseq
        %v327 = vshrl.u32 %v326, 7
        %v328 = vsub.s32 0, %v327
        %v329 = vrot.slane %v324, %v328
        %331 = vst [vmem:[%s319] sm:$0x3] %v329
      $region36: #{wifacct_forward.3} parent=31 // pred_fallthru
        _
      %v332 = vld [vmem:[%s290] sm:$0xff]
      %v333 = vld [vmem:[%s312] sm:$0xff]
      %v334 = vld [vmem:[%s312 + $0x8] sm:$0xff]
      %v335 = vld [vmem:[%s312 + $0x10] sm:$0xff]
      %v336 = vld [vmem:[%s312 + $0x18] sm:$0xff]
      %v337 = vld [vmem:[%s312 + $0x20] sm:$0xff]
      %v338 = vld [vmem:[%s312 + $0x28] sm:$0xff]
      %v339 = vld [vmem:[%s312 + $0x30] sm:$0xff]
      %v340 = vld [vmem:[%s312 + $0x38] sm:$0xff]
      %v341 = vld [vmem:[%s312 + $0x40] sm:$0xff]
      %v342 = vld [vmem:[%s312 + $0x48] sm:$0xff]
      %v343 = vld [vmem:[%s312 + $0x50] sm:$0xff]
      %v344 = vld [vmem:[%s312 + $0x58] sm:$0xff]
      %v345 = vld [vmem:[%s312 + $0x60] sm:$0xff]
      %v346 = vld [vmem:[%s312 + $0x68] sm:$0xff]
      %v347 = vld [vmem:[%s312 + $0x70] sm:$0xff]
      %v348 = vld [vmem:[%s312 + $0x78] sm:$0xff]
      %v349 = vld [vmem:[%s312 + $0x80] sm:$0xff]
      %v350 = vld [vmem:[%s312 + $0x88] sm:$0xff]
      %v351 = vld [vmem:[%s312 + $0x90] sm:$0xff]
      %v352 = vld [vmem:[%s312 + $0x98] sm:$0xff]
      %v353 = vld [vmem:[%s312 + $0xa0] sm:$0xff]
      %v354 = vld [vmem:[%s312 + $0xa8] sm:$0xff]
      %v355 = vld [vmem:[%s312 + $0xb0] sm:$0xff]
      %v356 = vld [vmem:[%s312 + $0xb8] sm:$0xff]
      %v357 = vld [vmem:[%s312 + $0xc0] sm:$0xff]
      %v358 = vld [vmem:[%s312 + $0xc8] sm:$0xff]
      %v359 = vld [vmem:[%s312 + $0xd0] sm:$0xff]
      %v360 = vld [vmem:[%s312 + $0xd8] sm:$0xff]
      %v361 = vld [vmem:[%s312 + $0xe0] sm:$0xff]
      %v362 = vld [vmem:[%s312 + $0xe8] sm:$0xff]
      %v363 = vld [vmem:[%s312 + $0xf0] sm:$0xff]
      %v364 = vld [vmem:[%s312 + $0xf8] sm:$0xff]
      %v365 = vld [vmem:[%s312 + $0x100] sm:$0xff]
      %v366 = vld [vmem:[%s312 + $0x108] sm:$0xff]
      %v367 = vld [vmem:[%s312 + $0x110] sm:$0xff]
      %v368 = vld [vmem:[%s312 + $0x118] sm:$0xff]
      %v369 = vld [vmem:[%s312 + $0x120] sm:$0xff]
      %v370 = vld [vmem:[%s312 + $0x128] sm:$0xff]
      %v371 = vld [vmem:[%s312 + $0x130] sm:$0xff]
      %v372 = vld [vmem:[%s312 + $0x138] sm:$0xff]
      %v373 = vld [vmem:[%s312 + $0x140] sm:$0xff]
      %v374 = vld [vmem:[%s312 + $0x148] sm:$0xff]
      %v375 = vld [vmem:[%s312 + $0x150] sm:$0xff]
      %v376 = vld [vmem:[%s312 + $0x158] sm:$0xff]
      %v377 = vld [vmem:[%s312 + $0x160] sm:$0xff]
      %v378 = vld [vmem:[%s312 + $0x168] sm:$0xff]
      %v379 = vld [vmem:[%s312 + $0x170] sm:$0xff]
      %v380 = vld [vmem:[%s312 + $0x178] sm:$0xff]
      %v381 = vld [vmem:[%s312 + $0x180] sm:$0xff]
      %v382 = vld [vmem:[%s312 + $0x188] sm:$0xff]
      %v383 = vld [vmem:[%s312 + $0x190] sm:$0xff]
      %v384 = vld [vmem:[%s312 + $0x198] sm:$0xff]
      %v385 = vld [vmem:[%s312 + $0x1a0] sm:$0xff]
      %v386 = vld [vmem:[%s312 + $0x1a8] sm:$0xff]
      %v387 = vld [vmem:[%s312 + $0x1b0] sm:$0xff]
      %v388 = vld [vmem:[%s312 + $0x1b8] sm:$0xff]
      %v389 = vld [vmem:[%s312 + $0x1c0] sm:$0xff]
      %v390 = vld [vmem:[%s312 + $0x1c8] sm:$0xff]
      %v391 = vld [vmem:[%s312 + $0x1d0] sm:$0xff]
      %v392 = vld [vmem:[%s312 + $0x1d8] sm:$0xff]
      %v393 = vld [vmem:[%s312 + $0x1e0] sm:$0xff]
      %v394 = vld [vmem:[%s312 + $0x1e8] sm:$0xff]
      %v395 = vld [vmem:[%s312 + $0x1f0] sm:$0xff]
      %v396 = vld [vmem:[%s312 + $0x1f8] sm:$0xff]
      %v398 = vcombine.high %v332, %v332
      %v400 = vunpack.c.l.s4 1983009808
      %v401 = vunpack.c.0.s8 %v400
      %v402 = vlaneseq
      %v403 = vshrl.u32 %v402, 7
      %v404 = vsub.s32 %v401, %v403
      %v405 = vrot.slane %v332, %v404
      %v407 = vunpack.c.l.s4 1983009808
      %v408 = vunpack.c.0.s8 %v407
      %v409 = vlaneseq
      %v410 = vshrl.u32 %v409, 7
      %v411 = vsub.s32 %v408, %v410
      %v412 = vrot.slane %v398, %v411
      %v413 = vcombine.high %v405, %v405
      %v414 = vcombine.high %v412, %v412
      %419 = vmatprep.subr.mxu0 0.0
      %420 = vmatpush1.msra.mxu0 %v348
      %421 = vmatprep.subr.mxu0 0.0
      %422 = vmatpush1.msra.mxu0 %v347
      %423 = vmatprep.subr.mxu0 0.0
      %424 = vmatpush1.msra.mxu0 %v346
      %425 = vmatprep.subr.mxu0 0.0
      %426 = vmatpush1.msra.mxu0 %v345
      %427 = vmatprep.subr.mxu0 0.0
      %428 = vmatpush1.msra.mxu0 %v344
      %429 = vmatprep.subr.mxu0 0.0
      %430 = vmatpush1.msra.mxu0 %v343
      %431 = vmatprep.subr.mxu0 0.0
      %432 = vmatpush1.msra.mxu0 %v342
      %433 = vmatprep.subr.mxu0 0.0
      %434 = vmatpush1.msra.mxu0 %v341
      %435 = vmatprep.subr.mxu0 0.0
      %436 = vmatpush1.msra.mxu0 %v340
      %437 = vmatprep.subr.mxu0 0.0
      %438 = vmatpush1.msra.mxu0 %v339
      %439 = vmatprep.subr.mxu0 0.0
      %440 = vmatpush1.msra.mxu0 %v338
      %441 = vmatprep.subr.mxu0 0.0
      %442 = vmatpush1.msra.mxu0 %v337
      %443 = vmatprep.subr.mxu0 0.0
      %444 = vmatpush1.msra.mxu0 %v336
      %445 = vmatprep.subr.mxu0 0.0
      %446 = vmatpush1.msra.mxu0 %v335
      %447 = vmatprep.subr.mxu0 0.0
      %448 = vmatpush1.msra.mxu0 %v334
      %449 = vmatprep.subr.mxu0 0.0
      %450 = vmatpush1.msra.mxu0 %v333
      %451 = vmatprep.subr.mxu0 0.0
      %452 = vmatpush2.msra.mxu0 %v364
      %453 = vmatprep.subr.mxu0 0.0
      %454 = vmatpush2.msra.mxu0 %v363
      %455 = vmatprep.subr.mxu0 0.0
      %456 = vmatpush2.msra.mxu0 %v362
      %457 = vmatprep.subr.mxu0 0.0
      %458 = vmatpush2.msra.mxu0 %v361
      %459 = vmatprep.subr.mxu0 0.0
      %460 = vmatpush2.msra.mxu0 %v360
      %461 = vmatprep.subr.mxu0 0.0
      %462 = vmatpush2.msra.mxu0 %v359
      %463 = vmatprep.subr.mxu0 0.0
      %464 = vmatpush2.msra.mxu0 %v358
      %465 = vmatprep.subr.mxu0 0.0
      %466 = vmatpush2.msra.mxu0 %v357
      %467 = vmatprep.subr.mxu0 0.0
      %468 = vmatpush2.msra.mxu0 %v356
      %469 = vmatprep.subr.mxu0 0.0
      %470 = vmatpush2.msra.mxu0 %v355
      %471 = vmatprep.subr.mxu0 0.0
      %472 = vmatpush2.msra.mxu0 %v354
      %473 = vmatprep.subr.mxu0 0.0
      %474 = vmatpush2.msra.mxu0 %v353
      %475 = vmatprep.subr.mxu0 0.0
      %476 = vmatpush2.msra.mxu0 %v352
      %477 = vmatprep.subr.mxu0 0.0
      %478 = vmatpush2.msra.mxu0 %v351
      %479 = vmatprep.subr.mxu0 0.0
      %480 = vmatpush2.msra.mxu0 %v350
      %481 = vmatprep.subr.mxu0 0.0
      %482 = vmatpush2.msra.mxu0 %v349
      %483 = vmatprep.mubr.f32.mxu0 %v413
      %484 = vmatmul.mubr.f32.gmra.mxu0 %v405
      %v485 = vpop.f32.mrf.mxu0
      %v486 = vadd.f32 0.0, %v485
      %v487 = vpop.f32.mrf.mxu0
      %488 = vdwg.mxu0
      %489 = vmatprep.subr.mxu0 0.0
      %490 = vmatpush1.msra.mxu0 %v380
      %491 = vmatprep.subr.mxu0 0.0
      %492 = vmatpush1.msra.mxu0 %v379
      %493 = vmatprep.subr.mxu0 0.0
      %494 = vmatpush1.msra.mxu0 %v378
      %495 = vmatprep.subr.mxu0 0.0
      %496 = vmatpush1.msra.mxu0 %v377
      %497 = vmatprep.subr.mxu0 0.0
      %498 = vmatpush1.msra.mxu0 %v376
      %499 = vmatprep.subr.mxu0 0.0
      %500 = vmatpush1.msra.mxu0 %v375
      %501 = vmatprep.subr.mxu0 0.0
      %502 = vmatpush1.msra.mxu0 %v374
      %503 = vmatprep.subr.mxu0 0.0
      %504 = vmatpush1.msra.mxu0 %v373
      %505 = vmatprep.subr.mxu0 0.0
      %506 = vmatpush1.msra.mxu0 %v372
      %507 = vmatprep.subr.mxu0 0.0
      %508 = vmatpush1.msra.mxu0 %v371
      %509 = vmatprep.subr.mxu0 0.0
      %510 = vmatpush1.msra.mxu0 %v370
      %511 = vmatprep.subr.mxu0 0.0
      %512 = vmatpush1.msra.mxu0 %v369
      %513 = vmatprep.subr.mxu0 0.0
      %514 = vmatpush1.msra.mxu0 %v368
      %515 = vmatprep.subr.mxu0 0.0
      %516 = vmatpush1.msra.mxu0 %v367
      %517 = vmatprep.subr.mxu0 0.0
      %518 = vmatpush1.msra.mxu0 %v366
      %519 = vmatprep.subr.mxu0 0.0
      %520 = vmatpush1.msra.mxu0 %v365
      %521 = vmatprep.subr.mxu0 0.0
      %522 = vmatpush2.msra.mxu0 %v396
      %523 = vmatprep.subr.mxu0 0.0
      %524 = vmatpush2.msra.mxu0 %v395
      %525 = vmatprep.subr.mxu0 0.0
      %526 = vmatpush2.msra.mxu0 %v394
      %527 = vmatprep.subr.mxu0 0.0
      %528 = vmatpush2.msra.mxu0 %v393
      %529 = vmatprep.subr.mxu0 0.0
      %530 = vmatpush2.msra.mxu0 %v392
      %531 = vmatprep.subr.mxu0 0.0
      %532 = vmatpush2.msra.mxu0 %v391
      %533 = vmatprep.subr.mxu0 0.0
      %534 = vmatpush2.msra.mxu0 %v390
      %535 = vmatprep.subr.mxu0 0.0
      %536 = vmatpush2.msra.mxu0 %v389
      %537 = vmatprep.subr.mxu0 0.0
      %538 = vmatpush2.msra.mxu0 %v388
      %539 = vmatprep.subr.mxu0 0.0
      %540 = vmatpush2.msra.mxu0 %v387
      %541 = vmatprep.subr.mxu0 0.0
      %542 = vmatpush2.msra.mxu0 %v386
      %543 = vmatprep.subr.mxu0 0.0
      %544 = vmatpush2.msra.mxu0 %v385
      %545 = vmatprep.subr.mxu0 0.0
      %546 = vmatpush2.msra.mxu0 %v384
      %547 = vmatprep.subr.mxu0 0.0
      %548 = vmatpush2.msra.mxu0 %v383
      %549 = vmatprep.subr.mxu0 0.0
      %550 = vmatpush2.msra.mxu0 %v382
      %551 = vmatprep.subr.mxu0 0.0
      %552 = vmatpush2.msra.mxu0 %v381
      %553 = vmatprep.mubr.f32.mxu0 %v414
      %554 = vmatmul.mubr.f32.gmra.mxu0 %v412
      %v555 = vpop.f32.mrf.mxu0
      %v556 = vadd.f32 %v486, %v555
      %v557 = vpop.f32.mrf.mxu0
      %558 = vdwg.mxu0
      %v559 = vld [vmem:[%s319] sm:$0x3]
      %v560 = vadd.f32 %v559, %v556
      %561 = vst [vmem:[%s319] sm:$0x3] %v560
      %p562 = scmp.lt.s32.totalorder %s18, 3
      %s563 = scalar_select %p562, %s18, 3
      %s564 = smul.addr %s563, 2
      %s565 = scalar_lea.vmem %s3, %s564
      // Predicated region
      $region37: #{wifacct_forward.3} parent=31 // pred_check
        %p566 = pneg %p150
      $region38: #{wifacct_forward.3} parent=31 // pred_check_branch
        %568 = sbr.rel (%p566) target = $region40
      $region39: #{wifacct_forward.3} parent=31 // pred_region
        _
      $region40: #{wifacct_forward.3} parent=31 // pred_fallthru
        _
    $region32: #{wifacct_forward.3} parent=5 // pred_fallthru
      _
    %p569 = scmp.le.s32.totalorder 2, %s9
    // Predicated region
    $region41: #{wifacct_forward.3} parent=5 // pred_check
      %p570 = pneg %p569
    $region42: #{wifacct_forward.3} parent=5 // pred_check_branch
      %572 = sbr.rel (%p570) target = $region44
    $region43: #{wifacct_forward.3} parent=5 // pred_region
      %s573 = ssub.s32 %s9, 2
      // Predicated region
      $region45: #{wifacct_forward.3} parent=43 // pred_check
        %p574 = pneg %p156
      $region46: #{wifacct_forward.3} parent=43 // pred_check_branch
        %576 = sbr.rel (%p574) target = $region48
      $region47: #{wifacct_forward.3} parent=43 // pred_region
        %p577 = scmp.lt.s32.totalorder %s20, 3
        %s578 = scalar_select %p577, %s20, 3
        %s579 = smul.addr %s578, 2
        %s580 = scalar_lea.vmem %s3, %s579
      $region48: #{wifacct_forward.3} parent=43 // pred_fallthru
        _
    $region44: #{wifacct_forward.3} parent=5 // pred_fallthru
      _
  $region6: #{wifacct_forward.3} parent=0 // loop_footer
    %s13 = sadd.s32 1, %s9
  $region7: #{wifacct_forward.3} parent=0 // loop_footer_branch
    %8 = sbr.rel target = $region3
  $region8: #{wifacct_forward.3} parent=0 // loop_exit
    _

</llo_original>
